<compile_context>
chip_gen: v5e
topology: v5e:2x2
jax: 0.10.0
libtpu: 0.0.40
codegen_flags: <defaults>
</compile_context>

<pallas_src>
import jax
import jax.numpy as jnp
from jax import lax
from jax.experimental import pallas as pl
from jax.experimental.pallas import tpu as pltpu

LAMBDA_NOOBJ = 0.5
LAMBDA_COORD = 5.0


def _round_up(x, m):
    return (x + m - 1) // m * m


def _make_yolo_kernel(D, N, tile_rows, needs_mask):
    """Builds the fused per-tile kernel (all shape params are static)."""
    lc2 = float(LAMBDA_COORD * LAMBDA_COORD)   # lambda_coord applied twice
    ln2 = float(LAMBDA_NOOBJ * LAMBDA_NOOBJ)   # lambda_noobj applied twice

    def kernel(pred_ref, targ_ref, out_ref):
        p = pred_ref[...].astype(jnp.float32)   # (T, D)
        t = targ_ref[...].astype(jnp.float32)   # (T, D)

        zero = jnp.float32(0.0)
        one = jnp.float32(1.0)

        # Per-lane constant weight rows built from iota compares
        # (compile-time static; no input DMA for the weight table).
        lane = lax.broadcasted_iota(jnp.int32, (1, D), 1)
        w1 = (jnp.where(lane < 2, jnp.float32(lc2), zero)            # box-1 xy
              + jnp.where(lane == 4, one, zero)                      # conf-1
              + jnp.where((lane >= 10) & (lane < 30), one, zero))    # class-1
        w2 = (jnp.where((lane >= 5) & (lane < 7), jnp.float32(lc2), zero)  # box-2 xy
              + jnp.where(lane == 9, one, zero)                            # conf-2
              + jnp.where(lane >= 30, one, zero))                          # class-2
        n1 = jnp.where(lane == 4, jnp.float32(ln2), zero)            # noobj-1
        n2 = jnp.where(lane == 9, jnp.float32(ln2), zero)            # noobj-2

        cm1 = t[:, 4:5]      # targets[..., 4].unsqueeze(-1)
        cm2 = t[:, 9:10]     # targets[..., 9].unsqueeze(-1)

        # NOTE: the reference's (sqrt(t_wh+eps) - sqrt(t_wh+eps))**2 term is
        # identically zero and is intentionally omitted.
        d2 = (t - p) ** 2
        w_obj = cm1 * w1 + cm2 * w2
        w_noobj = (1.0 - cm1) * n1 + (1.0 - cm2) * n2
        per_elem = w_obj * d2 + w_noobj * (p * p)   # (T, D)

        if needs_mask:
            # Last grid block overhangs past row N; the OOB region holds
            # unspecified data.  A where-select (NOT a multiply) zeroes both
            # loss terms there even if the garbage contains NaN/Inf.
            i = pl.program_id(0)
            row = lax.broadcasted_iota(jnp.int32, (tile_rows, 1), 0) + i * tile_rows
            per_elem = jnp.where(row < N, per_elem, zero)

        partial = jnp.sum(per_elem)                       # scalar per tile
        out_ref[...] = jnp.broadcast_to(partial, out_ref.shape)

    return kernel


def yolo_loss(predictions, targets, *, tile_rows=None):
    """Pallas implementation of YoloLoss.forward.

    predictions, targets: (batch, S, S, D) with D >= 31 (B=2 box layout).
    Returns a scalar float32 loss divided by the batch size.
    """
    assert predictions.shape == targets.shape
    batch, S1, S2, D = predictions.shape
    assert D >= 31, "needs the B=2 box layout (>=31 channels)"
    N = batch * S1 * S2

    pred2d = predictions.reshape(N, D)   # free (contiguous)
    targ2d = targets.reshape(N, D)

    # Tile selection: big tiles for DMA efficiency.  4096-row lane-padded f32
    # blocks -> 2 MiB/buffer, 8 MiB double-buffered for both inputs, within
    # every generation's default scoped VMEM (incl. v5e's 16 MiB).
    if tile_rows is None:
        tile_rows = min(4096, _round_up(N, 8))
    tile_rows = max(8, _round_up(tile_rows, 8))
    num_tiles = pl.cdiv(N, tile_rows)
    if num_tiles > 1 and num_tiles % 2 == 1:
        # Keep the parallel grid axis even so v7x's two TensorCores get
        # balanced work (no-op on v5e/v6e, single TC).
        tile_rows = max(8, _round_up(pl.cdiv(N, num_tiles + 1), 8))
        num_tiles = pl.cdiv(N, tile_rows)

    needs_mask = (num_tiles * tile_rows != N)   # static: tail mask only if needed
    kernel = _make_yolo_kernel(D, N, tile_rows, needs_mask)

    out = pl.pallas_call(
        kernel,
        out_shape=jax.ShapeDtypeStruct((num_tiles, 8, 128), jnp.float32),
        grid_spec=pltpu.PrefetchScalarGridSpec(
            num_scalar_prefetch=0,
            grid=(num_tiles,),
            in_specs=[
                pl.BlockSpec((tile_rows, D), lambda i: (i, 0)),   # predictions
                pl.BlockSpec((tile_rows, D), lambda i: (i, 0)),   # targets
            ],
            out_specs=pl.BlockSpec((1, 8, 128), lambda i: (i, 0, 0)),
        ),
        compiler_params=pltpu.CompilerParams(
            dimension_semantics=("parallel",)),   # independent per-tile partials
    )(pred2d, targ2d)

    # Tiny finalize reduction + loop-invariant 1/batch scale, once, in JAX.
    return jnp.sum(out[:, 0, 0]) / batch


def yolo_loss_ref(predictions, targets):
    """Pure-JAX reference mirroring the PyTorch forward exactly."""
    p = predictions.astype(jnp.float32)
    t = targets.astype(jnp.float32)
    batch = p.shape[0]
    cm1 = t[..., 4:5]
    cm2 = t[..., 9:10]
    sq1 = jnp.sqrt(t[..., 2:4] + 1e-06)
    sq2 = jnp.sqrt(t[..., 7:9] + 1e-06)
    coord1 = LAMBDA_COORD * jnp.sum(
        cm1 * ((t[..., :2] - p[..., :2]) ** 2 + (sq1 - sq1) ** 2))
    coord2 = LAMBDA_COORD * jnp.sum(
        cm2 * ((t[..., 5:7] - p[..., 5:7]) ** 2 + (sq2 - sq2) ** 2))
    coord = (coord1 + coord2) * LAMBDA_COORD
    conf = (jnp.sum(((t[..., 4] - p[..., 4]) ** 2)[..., None] * cm1)
            + jnp.sum(((t[..., 9] - p[..., 9]) ** 2)[..., None] * cm2))
    noobj = LAMBDA_NOOBJ * (
        LAMBDA_NOOBJ * jnp.sum((1 - cm1) * (p[..., 4] ** 2)[..., None])
        + LAMBDA_NOOBJ * jnp.sum((1 - cm2) * (p[..., 9] ** 2)[..., None]))
    cls = (jnp.sum(cm1 * (t[..., 10:30] - p[..., 10:30]) ** 2)
           + jnp.sum(cm2 * (t[..., 30:] - p[..., 30:]) ** 2))
    return (coord + conf + noobj + cls) / batch


if __name__ == "__main__":
    # Small YOLO-like shapes: batch=2, S=4 grid, D=50 features
    # (2 boxes * 5 + 2 * 20 class slots so the [..., 30:] slice is non-empty).
    batch, S, D = 2, 4, 50
    key = jax.random.PRNGKey(0)
    kp, kt, km1, km2 = jax.random.split(key, 4)

    predictions = jax.random.normal(kp, (batch, S, S, D), dtype=jnp.float32)
    targets = jax.random.uniform(kt, (batch, S, S, D), dtype=jnp.float32)
    # Binary object-presence masks, as real YOLO targets would be.
    mask1 = (jax.random.uniform(km1, (batch, S, S)) > 0.5).astype(jnp.float32)
    mask2 = (jax.random.uniform(km2, (batch, S, S)) > 0.5).astype(jnp.float32)
    targets = targets.at[..., 4].set(mask1).at[..., 9].set(mask2)

    ref = jax.block_until_ready(yolo_loss_ref(predictions, targets))

    # 1) default tiling (single full tile, no tail mask)
    loss = jax.block_until_ready(yolo_loss(predictions, targets))
    assert jnp.allclose(loss, ref, rtol=1e-5, atol=1e-5), (loss, ref)

    # 2) forced non-dividing tile -> exercises the padding-free in-kernel
    #    tail-row mask path (N=32 rows, tile_rows=24 -> 2 tiles, 16-row overhang)
    loss_masked = jax.block_until_ready(
        yolo_loss(predictions, targets, tile_rows=24))
    assert jnp.allclose(loss_masked, ref, rtol=1e-5, atol=1e-5), (loss_masked, ref)

    print("KERNEL_OK")
</pallas_src>

<mosaic_0001>
module attributes {stable_mosaic.version = 11 : i64} {
  func.func @kernel(%arg0: i32, %arg1: memref<32x50xf32, #tpu.memory_space<vmem>>, %arg2: memref<32x50xf32, #tpu.memory_space<vmem>>, %arg3: memref<1x8x128xf32, #tpu.memory_space<vmem>>) attributes {dimension_semantics = [#tpu.dimension_semantics<parallel>], iteration_bounds = array<i64: 1>, scalar_prefetch = 0 : i64, scratch_operands = 0 : i64, tpu.core_type = #tpu.core_type<tc>, window_params = [{transform_indices = @transform_0, window_bounds = array<i64: 32, 50>}, {transform_indices = @transform_1, window_bounds = array<i64: 32, 50>}, {transform_indices = @transform_2, window_bounds = array<i64: 1, 8, 128>}]} {
    %c0 = arith.constant 0 : index
    %c0_0 = arith.constant 0 : index
    %0 = vector.load %arg1[%c0, %c0_0] : memref<32x50xf32, #tpu.memory_space<vmem>>, vector<32x50xf32>
    %c0_1 = arith.constant 0 : index
    %c0_2 = arith.constant 0 : index
    %1 = vector.load %arg2[%c0_1, %c0_2] : memref<32x50xf32, #tpu.memory_space<vmem>>, vector<32x50xf32>
    %2 = tpu.iota {dimensions = array<i32: 1>} : vector<1x50xi32>
    %c2_i32 = arith.constant 2 : i32
    %3 = vector.broadcast %c2_i32 : i32 to vector<1x50xi32>
    %4 = arith.cmpi slt, %2, %3 : vector<1x50xi32>
    %cst = arith.constant 2.500000e+01 : f32
    %cst_3 = arith.constant 0.000000e+00 : f32
    %5 = vector.broadcast %cst : f32 to vector<1x50xf32>
    %6 = vector.broadcast %cst_3 : f32 to vector<1x50xf32>
    %7 = arith.select %4, %5, %6 : vector<1x50xi1>, vector<1x50xf32>
    %c4_i32 = arith.constant 4 : i32
    %8 = vector.broadcast %c4_i32 : i32 to vector<1x50xi32>
    %9 = arith.cmpi eq, %2, %8 : vector<1x50xi32>
    %cst_4 = arith.constant 1.000000e+00 : f32
    %cst_5 = arith.constant 0.000000e+00 : f32
    %10 = vector.broadcast %cst_4 : f32 to vector<1x50xf32>
    %11 = vector.broadcast %cst_5 : f32 to vector<1x50xf32>
    %12 = arith.select %9, %10, %11 : vector<1x50xi1>, vector<1x50xf32>
    %13 = arith.addf %7, %12 : vector<1x50xf32>
    %c10_i32 = arith.constant 10 : i32
    %14 = vector.broadcast %c10_i32 : i32 to vector<1x50xi32>
    %15 = arith.cmpi sge, %2, %14 : vector<1x50xi32>
    %c30_i32 = arith.constant 30 : i32
    %16 = vector.broadcast %c30_i32 : i32 to vector<1x50xi32>
    %17 = arith.cmpi slt, %2, %16 : vector<1x50xi32>
    %18 = arith.andi %15, %17 : vector<1x50xi1>
    %cst_6 = arith.constant 1.000000e+00 : f32
    %cst_7 = arith.constant 0.000000e+00 : f32
    %19 = vector.broadcast %cst_6 : f32 to vector<1x50xf32>
    %20 = vector.broadcast %cst_7 : f32 to vector<1x50xf32>
    %21 = arith.select %18, %19, %20 : vector<1x50xi1>, vector<1x50xf32>
    %22 = arith.addf %13, %21 : vector<1x50xf32>
    %c5_i32 = arith.constant 5 : i32
    %23 = vector.broadcast %c5_i32 : i32 to vector<1x50xi32>
    %24 = arith.cmpi sge, %2, %23 : vector<1x50xi32>
    %c7_i32 = arith.constant 7 : i32
    %25 = vector.broadcast %c7_i32 : i32 to vector<1x50xi32>
    %26 = arith.cmpi slt, %2, %25 : vector<1x50xi32>
    %27 = arith.andi %24, %26 : vector<1x50xi1>
    %cst_8 = arith.constant 2.500000e+01 : f32
    %cst_9 = arith.constant 0.000000e+00 : f32
    %28 = vector.broadcast %cst_8 : f32 to vector<1x50xf32>
    %29 = vector.broadcast %cst_9 : f32 to vector<1x50xf32>
    %30 = arith.select %27, %28, %29 : vector<1x50xi1>, vector<1x50xf32>
    %c9_i32 = arith.constant 9 : i32
    %31 = vector.broadcast %c9_i32 : i32 to vector<1x50xi32>
    %32 = arith.cmpi eq, %2, %31 : vector<1x50xi32>
    %cst_10 = arith.constant 1.000000e+00 : f32
    %cst_11 = arith.constant 0.000000e+00 : f32
    %33 = vector.broadcast %cst_10 : f32 to vector<1x50xf32>
    %34 = vector.broadcast %cst_11 : f32 to vector<1x50xf32>
    %35 = arith.select %32, %33, %34 : vector<1x50xi1>, vector<1x50xf32>
    %36 = arith.addf %30, %35 : vector<1x50xf32>
    %c30_i32_12 = arith.constant 30 : i32
    %37 = vector.broadcast %c30_i32_12 : i32 to vector<1x50xi32>
    %38 = arith.cmpi sge, %2, %37 : vector<1x50xi32>
    %cst_13 = arith.constant 1.000000e+00 : f32
    %cst_14 = arith.constant 0.000000e+00 : f32
    %39 = vector.broadcast %cst_13 : f32 to vector<1x50xf32>
    %40 = vector.broadcast %cst_14 : f32 to vector<1x50xf32>
    %41 = arith.select %38, %39, %40 : vector<1x50xi1>, vector<1x50xf32>
    %42 = arith.addf %36, %41 : vector<1x50xf32>
    %c4_i32_15 = arith.constant 4 : i32
    %43 = vector.broadcast %c4_i32_15 : i32 to vector<1x50xi32>
    %44 = arith.cmpi eq, %2, %43 : vector<1x50xi32>
    %cst_16 = arith.constant 2.500000e-01 : f32
    %cst_17 = arith.constant 0.000000e+00 : f32
    %45 = vector.broadcast %cst_16 : f32 to vector<1x50xf32>
    %46 = vector.broadcast %cst_17 : f32 to vector<1x50xf32>
    %47 = arith.select %44, %45, %46 : vector<1x50xi1>, vector<1x50xf32>
    %c9_i32_18 = arith.constant 9 : i32
    %48 = vector.broadcast %c9_i32_18 : i32 to vector<1x50xi32>
    %49 = arith.cmpi eq, %2, %48 : vector<1x50xi32>
    %cst_19 = arith.constant 2.500000e-01 : f32
    %cst_20 = arith.constant 0.000000e+00 : f32
    %50 = vector.broadcast %cst_19 : f32 to vector<1x50xf32>
    %51 = vector.broadcast %cst_20 : f32 to vector<1x50xf32>
    %52 = arith.select %49, %50, %51 : vector<1x50xi1>, vector<1x50xf32>
    %53 = vector.extract_strided_slice %1 {offsets = [0, 4], sizes = [32, 1], strides = [1, 1]} : vector<32x50xf32> to vector<32x1xf32>
    %54 = vector.extract_strided_slice %1 {offsets = [0, 9], sizes = [32, 1], strides = [1, 1]} : vector<32x50xf32> to vector<32x1xf32>
    %55 = arith.subf %1, %0 : vector<32x50xf32>
    %56 = arith.mulf %55, %55 : vector<32x50xf32>
    %57 = vector.broadcast %53 : vector<32x1xf32> to vector<32x50xf32>
    %58 = vector.broadcast %22 : vector<1x50xf32> to vector<32x50xf32>
    %59 = arith.mulf %57, %58 : vector<32x50xf32>
    %60 = vector.broadcast %54 : vector<32x1xf32> to vector<32x50xf32>
    %61 = vector.broadcast %42 : vector<1x50xf32> to vector<32x50xf32>
    %62 = arith.mulf %60, %61 : vector<32x50xf32>
    %63 = arith.addf %59, %62 : vector<32x50xf32>
    %cst_21 = arith.constant 1.000000e+00 : f32
    %64 = vector.broadcast %cst_21 : f32 to vector<32x1xf32>
    %65 = arith.subf %64, %53 : vector<32x1xf32>
    %66 = vector.broadcast %65 : vector<32x1xf32> to vector<32x50xf32>
    %67 = vector.broadcast %47 : vector<1x50xf32> to vector<32x50xf32>
    %68 = arith.mulf %66, %67 : vector<32x50xf32>
    %cst_22 = arith.constant 1.000000e+00 : f32
    %69 = vector.broadcast %cst_22 : f32 to vector<32x1xf32>
    %70 = arith.subf %69, %54 : vector<32x1xf32>
    %71 = vector.broadcast %70 : vector<32x1xf32> to vector<32x50xf32>
    %72 = vector.broadcast %52 : vector<1x50xf32> to vector<32x50xf32>
    %73 = arith.mulf %71, %72 : vector<32x50xf32>
    %74 = arith.addf %68, %73 : vector<32x50xf32>
    %75 = arith.mulf %63, %56 : vector<32x50xf32>
    %76 = arith.mulf %0, %0 : vector<32x50xf32>
    %77 = arith.mulf %74, %76 : vector<32x50xf32>
    %78 = arith.addf %75, %77 : vector<32x50xf32>
    %79 = vector.shape_cast %78 : vector<32x50xf32> to vector<1x32x50xf32>
    %cst_23 = arith.constant dense<0.000000e+00> : vector<1xf32>
    %80 = vector.multi_reduction <add>, %79, %cst_23 [1, 2] : vector<1x32x50xf32> to vector<1xf32>
    %81 = vector.shape_cast %80 : vector<1xf32> to vector<1x1x1xf32>
    %82 = vector.extract %81[0, 0, 0] : f32 from vector<1x1x1xf32>
    %83 = vector.broadcast %82 : f32 to vector<1x8x128xf32>
    %c0_24 = arith.constant 0 : index
    %c0_25 = arith.constant 0 : index
    %c0_26 = arith.constant 0 : index
    %84 = vector.load %arg3[%c0_24, %c0_25, %c0_26] : memref<1x8x128xf32, #tpu.memory_space<vmem>>, vector<1x8x128xf32>
    tpu.vector_store %arg3[%c0_24, %c0_25, %c0_26], %83 {strides = array<i32>} : memref<1x8x128xf32, #tpu.memory_space<vmem>>, vector<1x8x128xf32>,
    return
  }
  func.func @transform_0(%arg0: i32) -> (i32, i32) {
    %c0_i32 = arith.constant 0 : i32
    %c0_i32_0 = arith.constant 0 : i32
    return %arg0, %c0_i32 : i32, i32
  }
  func.func @transform_1(%arg0: i32) -> (i32, i32) {
    %c0_i32 = arith.constant 0 : i32
    %c0_i32_0 = arith.constant 0 : i32
    return %arg0, %c0_i32 : i32, i32
  }
  func.func @transform_2(%arg0: i32) -> (i32, i32, i32) {
    %c0_i32 = arith.constant 0 : i32
    %c0_i32_0 = arith.constant 0 : i32
    %c0_i32_1 = arith.constant 0 : i32
    return %arg0, %c0_i32, %c0_i32_0 : i32, i32, i32
  }
}

</mosaic_0001>

<llo_original>
// kernel: tpu_custom_call.1
$region0: #{tpu_custom_call.1}
  #allocation0 [shape = 'u32[]', space=smem, size = 0x4, offset = 0x4, fixed_abs, tag = 'smem constant byte address 0x4 - core index']
  #allocation1 [shape = 'u32[72,128]{1,0:T(1,128)}', space=vmem, size = 0x9000, scoped, tag = 'internal scratch']
  %s0 = inlined_call_operand.hbm [shape: f32[32,50], index: 0, kind: input, shape index: {}]
  %s1 = inlined_call_operand.hbm [shape: f32[32,50], index: 1, kind: input, shape index: {}]
  %s2 = inlined_call_operand.hbm [shape: f32[1,8,128], index: 2, kind: output, shape index: {}]
  %s3 = sld [smem:[#allocation0]]
  $region26: #{tpu_custom_call.1} parent=0
    _
  %s5 = ssub.s32 1, %s3
  %s6 = scalar_select 0, %s5, %s3
  $region1: #{tpu_custom_call.1} parent=0
    #allocation2 [shape = 'u8[16384]{0}', space=vmem, size = 0x4000, scoped, tag = 'input window, operand 0, single buffered']
    #allocation3 [shape = 's32[1]{0}', space=sflag, size = 0x4, scoped, tag = 'scoped memory for tpu_custom_call.1']
    #allocation4 [shape = 's32[1]{0}', space=sflag, size = 0x4, scoped, tag = 'scoped memory for tpu_custom_call.1']
    #allocation5 [shape = 'u8[16384]{0}', space=vmem, size = 0x4000, scoped, tag = 'input window, operand 1, single buffered']
    #allocation6 [shape = 's32[1]{0}', space=sflag, size = 0x4, scoped, tag = 'scoped memory for tpu_custom_call.1']
    #allocation7 [shape = 'u8[4096]{0}', space=vmem, size = 0x1000, scoped, tag = 'output window, operand 0, single buffered']
    %7 = vsyncpa [#allocation3], 0
    %8 = vsyncpa [#allocation6], 0
    %9 = vsyncpa [#allocation4], 0
    // Predicated region
    $region2: #{tpu_custom_call.1} parent=1 // pred_check
      _
    $region3: #{tpu_custom_call.1} parent=1 // pred_check_branch
      %11 = sbr.rel (0) target = $region5
    $region4: #{tpu_custom_call.1} parent=1 // pred_region
      %13 = vsyncadd [#allocation3], 0
      %s14 = sshll.u32 %s0, 4
      %s15 = int_to_ptr.hbm [resolvable:$true] %s14
      %s16 = sshll.u32 [#allocation2], 4
      %s17 = int_to_ptr.vmem [resolvable:$true] %s16
      %22 = dma.hbm_to_vmem [thread:$0]  %s15, 512, %s17, [#allocation3], 128, 128, 8
    $region5: #{tpu_custom_call.1} parent=1 // pred_fallthru
      _
    // Predicated region
    $region6: #{tpu_custom_call.1} parent=1 // pred_check
      _
    $region7: #{tpu_custom_call.1} parent=1 // pred_check_branch
      %24 = sbr.rel (0) target = $region9
    $region8: #{tpu_custom_call.1} parent=1 // pred_region
      %26 = vsyncadd [#allocation6], 0
      %s27 = sshll.u32 %s1, 4
      %s28 = int_to_ptr.hbm [resolvable:$true] %s27
      %s29 = sshll.u32 [#allocation5], 4
      %s30 = int_to_ptr.vmem [resolvable:$true] %s29
      %35 = dma.hbm_to_vmem [thread:$0]  %s28, 512, %s30, [#allocation6], 128, 128, 8
    $region9: #{tpu_custom_call.1} parent=1 // pred_fallthru
      _
    // Predicated region
    $region10: #{tpu_custom_call.1} parent=1 // pred_check
      _
    $region11: #{tpu_custom_call.1} parent=1 // pred_check_branch
      %37 = sbr.rel (0) target = $region13
    $region12: #{tpu_custom_call.1} parent=1 // pred_region
      %39 = dma.done [#allocation3], 512
    $region13: #{tpu_custom_call.1} parent=1 // pred_fallthru
      _
    // Predicated region
    $region14: #{tpu_custom_call.1} parent=1 // pred_check
      _
    $region15: #{tpu_custom_call.1} parent=1 // pred_check_branch
      %41 = sbr.rel (0) target = $region17
    $region16: #{tpu_custom_call.1} parent=1 // pred_region
      %43 = dma.done [#allocation6], 512
    $region17: #{tpu_custom_call.1} parent=1 // pred_fallthru
      _
    %v44 = vld [vmem:[#allocation2] sm:$0xff]
    %v45 = vld [vmem:[#allocation2 + $0x8] sm:$0xff]
    %v46 = vld [vmem:[#allocation2 + $0x10] sm:$0xff]
    %v47 = vld [vmem:[#allocation2 + $0x18] sm:$0xff]
    %v48 = vld [vmem:[#allocation5] sm:$0xff]
    %v49 = vld [vmem:[#allocation5 + $0x8] sm:$0xff]
    %v50 = vld [vmem:[#allocation5 + $0x10] sm:$0xff]
    %v51 = vld [vmem:[#allocation5 + $0x18] sm:$0xff]
    %v52 = vlaneseq
    %v53 = vand.u32 %v52, 127
    %vm54 = vcmp.lt.s32.totalorder %v53, 2
    %v55 = vsel %vm54, 25.0, 0.0
    %vm56 = vcmp.eq.s32.totalorder %v53, 4
    %v57 = vsel %vm56, 1.0, 0.0
    %v58 = vadd.f32 %v55, %v57
    %vm59 = vcmp.ge.s32.totalorder %v53, 10
    %vm60 = vcmp.lt.s32.totalorder %v53, 30
    %vm61 = vmand %vm59, %vm60
    %v62 = vsel %vm61, 1.0, 0.0
    %v63 = vadd.f32 %v58, %v62
    %vm64 = vcmp.ge.s32.totalorder %v53, 5
    %vm65 = vcmp.lt.s32.totalorder %v53, 7
    %vm66 = vmand %vm64, %vm65
    %v67 = vsel %vm66, 25.0, 0.0
    %vm68 = vcmp.eq.s32.totalorder %v53, 9
    %v69 = vsel %vm68, 1.0, 0.0
    %v70 = vadd.f32 %v67, %v69
    %vm71 = vcmp.ge.s32.totalorder %v53, 30
    %v72 = vsel %vm71, 1.0, 0.0
    %v73 = vadd.f32 %v70, %v72
    %v74 = vsel %vm56, 0.25, 0.0
    %v75 = vsel %vm68, 0.25, 0.0
    %v76 = vsub.f32 %v48, %v44
    %v77 = vsub.f32 %v49, %v45
    %v78 = vsub.f32 %v50, %v46
    %v79 = vsub.f32 %v51, %v47
    %v80 = vmul.f32 %v76, %v76
    %v81 = vmul.f32 %v77, %v77
    %v82 = vmul.f32 %v78, %v78
    %v83 = vmul.f32 %v79, %v79
    %85 = vset.pattern.permute.xlu0 4
    %86 = vperm.xlu0 %85, %v48
    %v87 = vpop.permute.xlu0 %86
    %90 = vset.pattern.permute.xlu0 4
    %91 = vperm.xlu0 %90, %v49
    %v92 = vpop.permute.xlu0 %91
    %95 = vset.pattern.permute.xlu0 4
    %96 = vperm.xlu0 %95, %v50
    %v97 = vpop.permute.xlu0 %96
    %100 = vset.pattern.permute.xlu0 4
    %101 = vperm.xlu0 %100, %v51
    %v102 = vpop.permute.xlu0 %101
    %v104 = vmul.f32 %v87, %v63
    %v105 = vmul.f32 %v92, %v63
    %v106 = vmul.f32 %v97, %v63
    %v107 = vmul.f32 %v102, %v63
    %108 = vset.pattern.permute.xlu0 9
    %109 = vperm.xlu0 %108, %v48
    %v110 = vpop.permute.xlu0 %109
    %112 = vset.pattern.permute.xlu0 9
    %113 = vperm.xlu0 %112, %v49
    %v114 = vpop.permute.xlu0 %113
    %116 = vset.pattern.permute.xlu0 9
    %117 = vperm.xlu0 %116, %v50
    %v118 = vpop.permute.xlu0 %117
    %120 = vset.pattern.permute.xlu0 9
    %121 = vperm.xlu0 %120, %v51
    %v122 = vpop.permute.xlu0 %121
    %v124 = vmul.f32 %v110, %v73
    %v125 = vmul.f32 %v114, %v73
    %v126 = vmul.f32 %v118, %v73
    %v127 = vmul.f32 %v122, %v73
    %v128 = vadd.f32 %v104, %v124
    %v129 = vadd.f32 %v105, %v125
    %v130 = vadd.f32 %v106, %v126
    %v131 = vadd.f32 %v107, %v127
    %v132 = vsub.f32 1.0, %v48
    %v133 = vsub.f32 1.0, %v49
    %v134 = vsub.f32 1.0, %v50
    %v135 = vsub.f32 1.0, %v51
    %137 = vset.pattern.permute.xlu0 4
    %138 = vperm.xlu0 %137, %v132
    %v139 = vpop.permute.xlu0 %138
    %142 = vset.pattern.permute.xlu0 4
    %143 = vperm.xlu0 %142, %v133
    %v144 = vpop.permute.xlu0 %143
    %147 = vset.pattern.permute.xlu0 4
    %148 = vperm.xlu0 %147, %v134
    %v149 = vpop.permute.xlu0 %148
    %152 = vset.pattern.permute.xlu0 4
    %153 = vperm.xlu0 %152, %v135
    %v154 = vpop.permute.xlu0 %153
    %v156 = vmul.f32 %v139, %v74
    %v157 = vmul.f32 %v144, %v74
    %v158 = vmul.f32 %v149, %v74
    %v159 = vmul.f32 %v154, %v74
    %160 = vset.pattern.permute.xlu0 9
    %161 = vperm.xlu0 %160, %v132
    %v162 = vpop.permute.xlu0 %161
    %164 = vset.pattern.permute.xlu0 9
    %165 = vperm.xlu0 %164, %v133
    %v166 = vpop.permute.xlu0 %165
    %168 = vset.pattern.permute.xlu0 9
    %169 = vperm.xlu0 %168, %v134
    %v170 = vpop.permute.xlu0 %169
    %172 = vset.pattern.permute.xlu0 9
    %173 = vperm.xlu0 %172, %v135
    %v174 = vpop.permute.xlu0 %173
    %v176 = vmul.f32 %v162, %v75
    %v177 = vmul.f32 %v166, %v75
    %v178 = vmul.f32 %v170, %v75
    %v179 = vmul.f32 %v174, %v75
    %v180 = vadd.f32 %v156, %v176
    %v181 = vadd.f32 %v157, %v177
    %v182 = vadd.f32 %v158, %v178
    %v183 = vadd.f32 %v159, %v179
    %v184 = vmul.f32 %v128, %v80
    %v185 = vmul.f32 %v129, %v81
    %v186 = vmul.f32 %v130, %v82
    %v187 = vmul.f32 %v131, %v83
    %v188 = vmul.f32 %v44, %v44
    %v189 = vmul.f32 %v45, %v45
    %v190 = vmul.f32 %v46, %v46
    %v191 = vmul.f32 %v47, %v47
    %v192 = vmul.f32 %v180, %v188
    %v193 = vmul.f32 %v181, %v189
    %v194 = vmul.f32 %v182, %v190
    %v195 = vmul.f32 %v183, %v191
    %v196 = vadd.f32 %v184, %v192
    %v197 = vadd.f32 %v185, %v193
    %v198 = vadd.f32 %v186, %v194
    %v199 = vadd.f32 %v187, %v195
    %vm200 = vcmask 408576
    %v201 = vsel %vm200, %v196, 0.0
    %v202 = vsel %vm200, %v197, 0.0
    %v203 = vadd.f32 %v201, %v202
    %v204 = vsel %vm200, %v198, 0.0
    %v205 = vadd.f32 %v203, %v204
    %v206 = vsel %vm200, %v199, 0.0
    %v207 = vadd.f32 %v205, %v206
    %208 = vadd.xlane.f32.xlu0 %v207
    %v209 = vpop.xlane.xlu0 %208
    %v210 = vrot.slane %v209, 4
    %v211 = vadd.f32 %v209, %v210
    %v212 = vrot.slane %v211, 2
    %v213 = vadd.f32 %v211, %v212
    %v214 = vrot.slane %v213, 1
    %v215 = vadd.f32 %v213, %v214
    %s216 = vtos %v215
    %v217 = vstv %s216
    %218 = vst [vmem:[#allocation7] sm:$0xff] %v217
    // Predicated region
    $region18: #{tpu_custom_call.1} parent=1 // pred_check
      _
    $region19: #{tpu_custom_call.1} parent=1 // pred_check_branch
      %220 = sbr.rel (0) target = $region21
    $region20: #{tpu_custom_call.1} parent=1 // pred_region
      %222 = vsyncadd [#allocation4], 0
      %s224 = sshll.u32 [#allocation7], 4
      %s225 = int_to_ptr.vmem [resolvable:$true] %s224
      %s226 = sshll.u32 %s2, 4
      %s227 = int_to_ptr.hbm [resolvable:$true] %s226
      %229 = dma.vmem_to_hbm [thread:$0]  %s225, 128, %s227, [#allocation4]
    $region21: #{tpu_custom_call.1} parent=1 // pred_fallthru
      _
    // Predicated region
    $region22: #{tpu_custom_call.1} parent=1 // pred_check
      _
    $region23: #{tpu_custom_call.1} parent=1 // pred_check_branch
      %231 = sbr.rel (0) target = $region25
    $region24: #{tpu_custom_call.1} parent=1 // pred_region
      %233 = dma.done [#allocation4], 128
    $region25: #{tpu_custom_call.1} parent=1 // pred_fallthru
      _
    %234 = vsyncpa [#allocation3], 1
    %235 = vsyncpa [#allocation6], 1
    %236 = vsyncpa [#allocation4], 1

</llo_original>
